<compile_context>
chip_gen: v7x
topology: tpu7x:2x2x1
jax: 0.10.0
libtpu: 0.0.40
codegen_flags: <defaults>
</compile_context>

<pallas_src>
import functools

import jax
import jax.numpy as jnp
from jax.experimental import pallas as pl
from jax.experimental.pallas import tpu as pltpu


NN = 1000
OUT_FEATURES = 361 * 3 * 4  # 4332
LAYER_DIMS = [
    (3, NN * 4),
    (NN * 4, NN * 2),
    (NN * 2, int(NN * 1.5)),
    (int(NN * 1.5), OUT_FEATURES),
]
NEG_SLOPE = 0.01  # nn.LeakyReLU default negative_slope

# Largest bf16 weight tile a single grid step streams (double-buffered by the
# pipeline).  2 x 8 MiB + resident activations/outputs stays well under the
# 48 MiB vmem limit requested below, which fits all generations.
WEIGHT_TILE_BYTES = 8 * 1024 * 1024
VMEM_LIMIT_BYTES = 48 * 1024 * 1024


def _round_up(x, m):
    return (x + m - 1) // m * m


def _choose_tn(n_pad, k_pad, elem_bytes=2, tile_cap_bytes=WEIGHT_TILE_BYTES,
               min_tiles=2):
    """Largest multiple-of-128 divisor of n_pad whose (k_pad, tn) bf16 weight
    tile fits the byte budget, preferring >=min_tiles N-tiles so the parallel
    grid axis can shard across v7x's two TensorCores."""
    fitting = []
    for t in range(128, n_pad + 1, 128):
        if n_pad % t:
            continue
        if k_pad * t * elem_bytes > tile_cap_bytes:
            continue
        fitting.append(t)
    if not fitting:
        return 128
    multi = [t for t in fitting if n_pad // t >= min_tiles]
    return max(multi) if multi else max(fitting)


def fused_linear_kernel(x_ref, w_ref, b_ref, o_ref, *, apply_leaky_relu,
                        negative_slope):
    # Whole (padded) activation is VMEM-resident; weights stream as bf16 tiles.
    x = x_ref[...].astype(jnp.bfloat16)
    acc = jnp.dot(x, w_ref[...], preferred_element_type=jnp.float32)
    y = acc + b_ref[...]
    if apply_leaky_relu:
        y = jnp.where(y > 0, y, negative_slope * y)
    o_ref[...] = y.astype(o_ref.dtype)


def fused_linear(x, w_pad, b_pad, *, apply_leaky_relu, negative_slope=NEG_SLOPE):
    """x: [M, K_pad] f32; w_pad: [K_pad, N_pad] bf16; b_pad: [1, N_pad] f32."""
    m, k_pad = x.shape
    kw, n_pad = w_pad.shape
    assert kw == k_pad, (kw, k_pad)
    tn = _choose_tn(n_pad, k_pad)
    grid = (n_pad // tn,)

    kernel = functools.partial(fused_linear_kernel,
                               apply_leaky_relu=apply_leaky_relu,
                               negative_slope=negative_slope)
    return pl.pallas_call(
        kernel,
        out_shape=jax.ShapeDtypeStruct((m, n_pad), jnp.float32),
        grid_spec=pltpu.PrefetchScalarGridSpec(
            num_scalar_prefetch=0,
            grid=grid,
            in_specs=[
                pl.BlockSpec((m, k_pad), lambda n: (0, 0)),   # resident activations
                pl.BlockSpec((k_pad, tn), lambda n: (0, n)),  # streamed bf16 weights
                pl.BlockSpec((1, tn), lambda n: (0, n)),      # bias tile (f32)
            ],
            out_specs=pl.BlockSpec((m, tn), lambda n: (0, n)),
        ),
        compiler_params=pltpu.CompilerParams(
            dimension_semantics=("parallel",),
            vmem_limit_bytes=VMEM_LIMIT_BYTES),
    )(x, w_pad, b_pad)


def prepare_params(params):
    """Hoisted once-per-parameter-set prep: transpose to [in, out], zero-pad to
    lane/sublane-friendly sizes, cast weights to bf16 (accumulation stays f32
    in the kernel; bias/epilogue stay f32). Padded lanes stay exactly zero
    through every layer, so results are unchanged by the padding."""
    prepared = []
    for w, b in params:  # PyTorch layout: w [out, in], b [out]
        out_f, in_f = w.shape
        # K: 128-multiples for the big layers; the 3-wide input layer only
        # needs the bf16 sublane multiple (16), avoiding a 16x row inflation.
        k_pad = _round_up(in_f, 128) if in_f >= 128 else _round_up(in_f, 16)
        n_pad = _round_up(out_f, 128)
        w_p = (jnp.zeros((k_pad, n_pad), jnp.float32)
               .at[:in_f, :out_f].set(jnp.asarray(w).T)
               .astype(jnp.bfloat16))
        b_p = jnp.zeros((1, n_pad), jnp.float32).at[0, :out_f].set(b)
        prepared.append((w_p, b_p))
    return prepared


def fc_benchmark_forward(x, prepared):
    """x: [batch, 3]; prepared: output of prepare_params. Returns [batch, 361, 3, 4]."""
    batch, in_f = x.shape
    k0_pad = prepared[0][0].shape[0]
    # Cheap per-call glue: zero-pad the 3 input features up to k0_pad (=16).
    h = jnp.zeros((batch, k0_pad), jnp.float32).at[:, :in_f].set(x)
    n_layers = len(prepared)
    for i, (w_p, b_p) in enumerate(prepared):
        h = fused_linear(h, w_p, b_p, apply_leaky_relu=(i < n_layers - 1))
    out = h[:, :OUT_FEATURES]
    return out.reshape(-1, 361, 3, 4)


def init_linear(key, in_f, out_f):
    # Deterministic init mimicking PyTorch nn.Linear default (uniform +- 1/sqrt(in)).
    kw, kb = jax.random.split(key)
    bound = 1.0 / (in_f ** 0.5)
    w = jax.random.uniform(kw, (out_f, in_f), jnp.float32, -bound, bound)
    b = jax.random.uniform(kb, (out_f,), jnp.float32, -bound, bound)
    return w, b


if __name__ == "__main__":
    key = jax.random.PRNGKey(0)
    batch = 8
    input_size = 3

    keys = jax.random.split(key, len(LAYER_DIMS) + 1)
    params = [init_linear(keys[i + 1], in_f, out_f)
              for i, (in_f, out_f) in enumerate(LAYER_DIMS)]
    x = jax.random.normal(keys[0], (batch, input_size), jnp.float32)

    prepared = prepare_params(params)          # transpose + pad + bf16, hoisted
    prepared = jax.block_until_ready(prepared)

    out = fc_benchmark_forward(x, prepared)
    out = jax.block_until_ready(out)

    # Pure-JAX f32 reference (same math as the PyTorch forward).
    with jax.default_matmul_precision("highest"):
        ref = x
        for i, (w, b) in enumerate(params):
            ref = ref @ w.T + b
            if i < len(params) - 1:
                ref = jnp.where(ref > 0, ref, NEG_SLOPE * ref)
        ref = ref.reshape(-1, 361, 3, 4)

    assert out.shape == (batch, 361, 3, 4), out.shape
    err = float(jnp.max(jnp.abs(out - ref)))
    scale = float(jnp.max(jnp.abs(ref))) + 1e-6
    assert err <= 2e-2 * scale, f"mismatch vs reference: max_err={err}, scale={scale}"

    print("KERNEL_OK")
</pallas_src>

<mosaic_0001>
module attributes {stable_mosaic.version = 11 : i64} {
  func.func @fused_linear_kernel(%arg0: i32, %arg1: memref<8x16xf32, #tpu.memory_space<vmem>>, %arg2: memref<16x2048xbf16, #tpu.memory_space<vmem>>, %arg3: memref<1x2048xf32, #tpu.memory_space<vmem>>, %arg4: memref<8x2048xf32, #tpu.memory_space<vmem>>) attributes {dimension_semantics = [#tpu.dimension_semantics<parallel>], iteration_bounds = array<i64: 2>, scalar_prefetch = 0 : i64, scratch_operands = 0 : i64, tpu.core_type = #tpu.core_type<tc>, window_params = [{pipeline_mode = #tpu.pipeline_mode<synchronous>, transform_indices = @transform_0, window_bounds = array<i64: 8, 16>}, {transform_indices = @transform_1, window_bounds = array<i64: 16, 2048>}, {transform_indices = @transform_2, window_bounds = array<i64: 1, 2048>}, {transform_indices = @transform_3, window_bounds = array<i64: 8, 2048>}]} {
    %c0 = arith.constant 0 : index
    %c0_0 = arith.constant 0 : index
    %0 = vector.load %arg1[%c0, %c0_0] : memref<8x16xf32, #tpu.memory_space<vmem>>, vector<8x16xf32>
    %1 = arith.truncf %0 : vector<8x16xf32> to vector<8x16xbf16>
    %c0_1 = arith.constant 0 : index
    %c0_2 = arith.constant 0 : index
    %2 = vector.load %arg2[%c0_1, %c0_2] : memref<16x2048xbf16, #tpu.memory_space<vmem>>, vector<16x2048xbf16>
    %cst = arith.constant dense<0.000000e+00> : vector<8x2048xf32>
    %3 = tpu.matmul %1, %2, %cst {dimension_numbers = #tpu.dot_dimension_numbers<[1], [0], [0], [1], [0, 0, 1, 1], [], []>} : vector<8x16xbf16>, vector<16x2048xbf16>, vector<8x2048xf32> -> vector<8x2048xf32>
    %c0_3 = arith.constant 0 : index
    %c0_4 = arith.constant 0 : index
    %4 = vector.load %arg3[%c0_3, %c0_4] : memref<1x2048xf32, #tpu.memory_space<vmem>>, vector<1x2048xf32>
    %5 = vector.broadcast %4 : vector<1x2048xf32> to vector<8x2048xf32>
    %6 = arith.addf %3, %5 : vector<8x2048xf32>
    %cst_5 = arith.constant 0.000000e+00 : f32
    %7 = vector.broadcast %cst_5 : f32 to vector<8x2048xf32>
    %8 = arith.cmpf ogt, %6, %7 : vector<8x2048xf32>
    %cst_6 = arith.constant 0.00999999977 : f32
    %9 = vector.broadcast %cst_6 : f32 to vector<8x2048xf32>
    %10 = arith.mulf %9, %6 : vector<8x2048xf32>
    %11 = arith.select %8, %6, %10 : vector<8x2048xi1>, vector<8x2048xf32>
    %c0_7 = arith.constant 0 : index
    %c0_8 = arith.constant 0 : index
    %12 = vector.load %arg4[%c0_7, %c0_8] : memref<8x2048xf32, #tpu.memory_space<vmem>>, vector<8x2048xf32>
    tpu.vector_store %arg4[%c0_7, %c0_8], %11 {strides = array<i32>} : memref<8x2048xf32, #tpu.memory_space<vmem>>, vector<8x2048xf32>,
    return
  }
  func.func @transform_0(%arg0: i32) -> (i32, i32) {
    %c0_i32 = arith.constant 0 : i32
    %c0_i32_0 = arith.constant 0 : i32
    %c0_i32_1 = arith.constant 0 : i32
    return %c0_i32, %c0_i32_0 : i32, i32
  }
  func.func @transform_1(%arg0: i32) -> (i32, i32) {
    %c0_i32 = arith.constant 0 : i32
    %c0_i32_0 = arith.constant 0 : i32
    return %c0_i32, %arg0 : i32, i32
  }
  func.func @transform_2(%arg0: i32) -> (i32, i32) {
    %c0_i32 = arith.constant 0 : i32
    %c0_i32_0 = arith.constant 0 : i32
    return %c0_i32, %arg0 : i32, i32
  }
  func.func @transform_3(%arg0: i32) -> (i32, i32) {
    %c0_i32 = arith.constant 0 : i32
    %c0_i32_0 = arith.constant 0 : i32
    return %c0_i32, %arg0 : i32, i32
  }
}

</mosaic_0001>

<llo_original>
// kernel: tpu_custom_call.1
$region0: #{tpu_custom_call.1}
  #allocation0 [shape = 'u32[]', space=smem, size = 0x4, offset = 0x4, fixed_abs, tag = 'smem constant byte address 0x4 - core index']
  #allocation1 [shape = 'u32[144,128]{1,0:T(1,128)}', space=vmem, size = 0x12000, scoped, tag = 'internal scratch']
  %s0 = inlined_call_operand.hbm [shape: f32[8,16], index: 0, kind: input, shape index: {}]
  %s1 = inlined_call_operand.hbm [shape: bf16[16,4096], index: 1, kind: input, shape index: {}]
  %s2 = inlined_call_operand.hbm [shape: f32[1,4096], index: 2, kind: input, shape index: {}]
  %s3 = inlined_call_operand.hbm [shape: f32[8,4096], index: 3, kind: output, shape index: {}]
  %s4 = sld [smem:[#allocation0]]
  $region57: #{tpu_custom_call.1} parent=0
    _
  %s6 = ssub.s32 1, %s4
  %s7 = scalar_select 0, %s6, %s4
  $region1: #{tpu_custom_call.1} parent=0
    #allocation2 [shape = 'u8[4096]{0}', space=vmem, size = 0x1000, scoped, tag = 'input window, operand 0, single buffered']
    #allocation3 [shape = 's32[2]{0}', space=sflag, size = 0x8, scoped, tag = 'scoped memory for tpu_custom_call.1']
    #allocation4 [shape = 's32[2]{0}', space=sflag, size = 0x8, scoped, tag = 'scoped memory for tpu_custom_call.1']
    #allocation5 [shape = 'u8[131072]{0}', space=vmem, size = 0x20000, scoped, tag = 'input window, operand 1']
    #allocation6 [shape = 's32[2]{0}', space=sflag, size = 0x8, scoped, tag = 'scoped memory for tpu_custom_call.1']
    #allocation7 [shape = 'u8[16384]{0}', space=vmem, size = 0x4000, scoped, tag = 'input window, operand 2']
    #allocation8 [shape = 'u8[131072]{0}', space=vmem, size = 0x20000, scoped, tag = 'output window, operand 0']
    %8 = vsyncpa [#allocation3], 0
    %9 = vsyncpa [#allocation6], 0
    %s10 = scalar_lea.sflag [#allocation6], 1
    %11 = vsyncpa %s10, 0
    %12 = vsyncpa [#allocation4], 0
    %s13 = scalar_lea.sflag [#allocation4], 1
    %14 = vsyncpa %s13, 0
    loop: start=0, step=1, limit=4
    $region2: #{tpu_custom_call.1} parent=1 // loop_pre_header
      _
    $region3: #{tpu_custom_call.1} parent=1 // loop_header
      %s16 = sphi 0, %s20
      %p17 = scmp.ge.s32.totalorder %s16, 4
      %s24 = sphi 0, %s24
      %s26 = sphi 0, %s24
      %s27 = sphi 0, %s26
      %s41 = sphi 0, %s27
      %s47 = sphi 0, %s49
      %s50 = sphi 0, %s47
      %s51 = sphi 0, %s50
      %s67 = sphi 0, %s51
      %s73 = sphi 0, %s75
      %s76 = sphi 0, %s73
      %s77 = sphi 0, %s76
      %s93 = sphi 0, %s77
      %s99 = sphi 0, %s101
      %s102 = sphi 0, %s99
      %s103 = sphi 0, %s102
      %s119 = sphi 0, %s103
    $region4: #{tpu_custom_call.1} parent=1 // loop_header_branch
      %19 = sbr.rel (%p17) target = $region8
    $region5: #{tpu_custom_call.1} parent=1 // loop_body
      %s21 = ssub.s32 %s16, 1
      %s22 = ssub.s32 %s16, 2
      %s23 = sadd.s32 %s16, 1
      %s25 = sadd.s32 %s24, 1
      %p28 = scmp.eq.s32.totalorder %s16, 1
      %p29 = scmp.ne.s32.totalorder %s24, %s26
      %p30 = scmp.eq.s32.totalorder %s16, 0
      %p31 = por %p29, %p30
      %p32 = scmp.ne.s32.totalorder %s24, %s26
      %p33 = scmp.eq.s32.totalorder %s21, 1
      %p34 = por %p32, %p33
      %p35 = scmp.ne.s32.totalorder %s26, %s27
      %p36 = scmp.eq.s32.totalorder %s21, 0
      %p37 = por %p35, %p36
      %p38 = scmp.ne.s32.totalorder %s26, %s27
      %p39 = scmp.eq.s32.totalorder %s22, 1
      %p40 = por %p38, %p39
      %p42 = scmp.ne.s32.totalorder %s27, %s41
      %p43 = scmp.eq.s32.totalorder %s22, 0
      %p44 = por %p42, %p43
      %s45 = ssub.s32 %s16, %s23
      %p46 = scmp.eq.s32.totalorder %s45, 0
      %s48 = sadd.s32 %s47, 1
      %s49 = scalar_select %p46, %s47, %s48
      %p52 = pneg %p46
      %p53 = scmp.eq.s32.totalorder %s16, 1
      %p54 = por %p52, %p53
      %p55 = scmp.ne.s32.totalorder %s47, %s50
      %p56 = scmp.eq.s32.totalorder %s16, 0
      %p57 = por %p55, %p56
      %p58 = scmp.ne.s32.totalorder %s47, %s50
      %p59 = scmp.eq.s32.totalorder %s21, 1
      %p60 = por %p58, %p59
      %p61 = scmp.ne.s32.totalorder %s50, %s51
      %p62 = scmp.eq.s32.totalorder %s21, 0
      %p63 = por %p61, %p62
      %p64 = scmp.ne.s32.totalorder %s50, %s51
      %p65 = scmp.eq.s32.totalorder %s22, 1
      %p66 = por %p64, %p65
      %p68 = scmp.ne.s32.totalorder %s51, %s67
      %p69 = scmp.eq.s32.totalorder %s22, 0
      %p70 = por %p68, %p69
      %s71 = ssub.s32 %s16, %s23
      %p72 = scmp.eq.s32.totalorder %s71, 0
      %s74 = sadd.s32 %s73, 1
      %s75 = scalar_select %p72, %s73, %s74
      %p78 = pneg %p72
      %p79 = scmp.eq.s32.totalorder %s16, 1
      %p80 = por %p78, %p79
      %p81 = scmp.ne.s32.totalorder %s73, %s76
      %p82 = scmp.eq.s32.totalorder %s16, 0
      %p83 = por %p81, %p82
      %p84 = scmp.ne.s32.totalorder %s73, %s76
      %p85 = scmp.eq.s32.totalorder %s21, 1
      %p86 = por %p84, %p85
      %p87 = scmp.ne.s32.totalorder %s76, %s77
      %p88 = scmp.eq.s32.totalorder %s21, 0
      %p89 = por %p87, %p88
      %p90 = scmp.ne.s32.totalorder %s76, %s77
      %p91 = scmp.eq.s32.totalorder %s22, 1
      %p92 = por %p90, %p91
      %p94 = scmp.ne.s32.totalorder %s77, %s93
      %p95 = scmp.eq.s32.totalorder %s22, 0
      %p96 = por %p94, %p95
      %s97 = ssub.s32 %s16, %s23
      %p98 = scmp.eq.s32.totalorder %s97, 0
      %s100 = sadd.s32 %s99, 1
      %s101 = scalar_select %p98, %s99, %s100
      %p104 = pneg %p98
      %p105 = scmp.eq.s32.totalorder %s16, 1
      %p106 = por %p104, %p105
      %p107 = scmp.ne.s32.totalorder %s99, %s102
      %p108 = scmp.eq.s32.totalorder %s16, 0
      %p109 = por %p107, %p108
      %p110 = scmp.ne.s32.totalorder %s99, %s102
      %p111 = scmp.eq.s32.totalorder %s21, 1
      %p112 = por %p110, %p111
      %p113 = scmp.ne.s32.totalorder %s102, %s103
      %p114 = scmp.eq.s32.totalorder %s21, 0
      %p115 = por %p113, %p114
      %p116 = scmp.ne.s32.totalorder %s102, %s103
      %p117 = scmp.eq.s32.totalorder %s22, 1
      %p118 = por %p116, %p117
      %p120 = scmp.ne.s32.totalorder %s103, %s119
      %p121 = scmp.eq.s32.totalorder %s22, 0
      %p122 = por %p120, %p121
      %p123 = scmp.le.s32.totalorder 1, %s16
      %p124 = scmp.lt.s32.totalorder %s16, 3
      %p125 = pnand %p123, %p124
      %p126 = pneg %p125
      // Predicated region
      $region9: #{tpu_custom_call.1} parent=5 // pred_check
        _
      $region10: #{tpu_custom_call.1} parent=5 // pred_check_branch
        %128 = sbr.rel (%p125) target = $region12
      $region11: #{tpu_custom_call.1} parent=5 // pred_region
        %s129 = ssub.s32 %s16, 1
        // Predicated region
        $region13: #{tpu_custom_call.1} parent=11 // pred_check
          %p130 = pneg %p37
        $region14: #{tpu_custom_call.1} parent=11 // pred_check_branch
          %132 = sbr.rel (%p130) target = $region16
        $region15: #{tpu_custom_call.1} parent=11 // pred_region
          %s134 = ssub.s32 128, 128
          %135 = vsyncadd [#allocation3], %s134
          %s137 = sshll.u32 [#allocation2], 4
          %s138 = int_to_ptr.vmem [resolvable:$true] %s137
          %140 = dma.hbm_to_vmem [thread:$0]  %s0, 128, %s138, [#allocation3]
        $region16: #{tpu_custom_call.1} parent=11 // pred_fallthru
          _
      $region12: #{tpu_custom_call.1} parent=5 // pred_fallthru
        _
      %p141 = scmp.lt.s32.totalorder %s16, 2
      // Predicated region
      $region17: #{tpu_custom_call.1} parent=5 // pred_check
        %p142 = pneg %p141
      $region18: #{tpu_custom_call.1} parent=5 // pred_check_branch
        %144 = sbr.rel (%p142) target = $region20
      $region19: #{tpu_custom_call.1} parent=5 // pred_region
        // Predicated region
        $region21: #{tpu_custom_call.1} parent=19 // pred_check
          %p145 = pneg %p57
        $region22: #{tpu_custom_call.1} parent=19 // pred_check_branch
          %147 = sbr.rel (%p145) target = $region24
        $region23: #{tpu_custom_call.1} parent=19 // pred_region
          %s148 = sand.u32 %s16, 1
          %s149 = scalar_lea.sflag [#allocation6], %s148
          %s150 = sand.u32 %s47, 1
          %s151 = smul.addr %s150, 128
          %s152 = scalar_lea.vmem [#allocation5], %s151
          %s153 = smul.u32 16, %s16
          %s155 = ssub.s32 2048, 2048
          %156 = vsyncadd %s149, %s155
          %s157 = smul.addr %s153, 64
          %s158 = scalar_lea.hbm %s1, %s157
          %s159 = sshll.u32 %s152, 4
          %s160 = int_to_ptr.vmem [resolvable:$true] %s159
          %165 = dma.hbm_to_vmem [thread:$0]  %s158, 2048, %s160, %s149, 2048, 1024, 64
        $region24: #{tpu_custom_call.1} parent=19 // pred_fallthru
          _
        // Predicated region
        $region25: #{tpu_custom_call.1} parent=19 // pred_check
          %p166 = pneg %p83
        $region26: #{tpu_custom_call.1} parent=19 // pred_check_branch
          %168 = sbr.rel (%p166) target = $region28
        $region27: #{tpu_custom_call.1} parent=19 // pred_region
          %s169 = sand.u32 %s16, 1
          %s170 = scalar_lea.sflag [#allocation6], %s169
          %s171 = sand.u32 %s73, 1
          %s172 = smul.addr %s171, 16
          %s173 = scalar_lea.vmem [#allocation7], %s172
          %s174 = smul.u32 16, %s16
          %s176 = ssub.s32 256, 256
          %177 = vsyncadd %s170, %s176
          %s178 = smul.addr %s174, 16
          %s179 = scalar_lea.hbm %s2, %s178
          %s181 = sshll.u32 %s173, 4
          %s182 = int_to_ptr.vmem [resolvable:$true] %s181
          %184 = dma.hbm_to_vmem [thread:$0]  %s179, 256, %s182, %s170
        $region28: #{tpu_custom_call.1} parent=19 // pred_fallthru
          _
      $region20: #{tpu_custom_call.1} parent=5 // pred_fallthru
        _
      %p185 = scmp.le.s32.totalorder 1, %s16
      %p186 = scmp.lt.s32.totalorder %s16, 3
      %p187 = pnand %p185, %p186
      %p188 = pneg %p187
      // Predicated region
      $region29: #{tpu_custom_call.1} parent=5 // pred_check
        _
      $region30: #{tpu_custom_call.1} parent=5 // pred_check_branch
        %190 = sbr.rel (%p187) target = $region32
      $region31: #{tpu_custom_call.1} parent=5 // pred_region
        %s191 = ssub.s32 %s16, 1
        // Predicated region
        $region33: #{tpu_custom_call.1} parent=31 // pred_check
          %p192 = pneg %p37
        $region34: #{tpu_custom_call.1} parent=31 // pred_check_branch
          %194 = sbr.rel (%p192) target = $region36
        $region35: #{tpu_custom_call.1} parent=31 // pred_region
          %195 = dma.done [#allocation3], 128
        $region36: #{tpu_custom_call.1} parent=31 // pred_fallthru
          _
        %s196 = sand.u32 %s21, 1
        %s197 = scalar_lea.sflag [#allocation6], %s196
        %s198 = sand.u32 %s50, 1
        %s199 = smul.addr %s198, 128
        %s200 = scalar_lea.vmem [#allocation5], %s199
        // Predicated region
        $region37: #{tpu_custom_call.1} parent=31 // pred_check
          %p201 = pneg %p63
        $region38: #{tpu_custom_call.1} parent=31 // pred_check_branch
          %203 = sbr.rel (%p201) target = $region40
        $region39: #{tpu_custom_call.1} parent=31 // pred_region
          %204 = dma.done %s197, 2048
        $region40: #{tpu_custom_call.1} parent=31 // pred_fallthru
          _
        %s205 = sand.u32 %s21, 1
        %s206 = scalar_lea.sflag [#allocation6], %s205
        %s207 = sand.u32 %s76, 1
        %s208 = smul.addr %s207, 16
        %s209 = scalar_lea.vmem [#allocation7], %s208
        // Predicated region
        $region41: #{tpu_custom_call.1} parent=31 // pred_check
          %p210 = pneg %p89
        $region42: #{tpu_custom_call.1} parent=31 // pred_check_branch
          %212 = sbr.rel (%p210) target = $region44
        $region43: #{tpu_custom_call.1} parent=31 // pred_region
          %213 = dma.done %s206, 256
        $region44: #{tpu_custom_call.1} parent=31 // pred_fallthru
          _
        %p214 = pneg %p37
        %p215 = pneg %p34
        %s216 = sand.u32 %s21, 1
        %s217 = scalar_lea.sflag [#allocation6], %s216
        %s218 = sand.u32 %s50, 1
        %s219 = smul.addr %s218, 128
        %s220 = scalar_lea.vmem [#allocation5], %s219
        %p221 = pneg %p63
        %p222 = pneg %p60
        %s223 = sand.u32 %s21, 1
        %s224 = scalar_lea.sflag [#allocation6], %s223
        %s225 = sand.u32 %s76, 1
        %s226 = smul.addr %s225, 16
        %s227 = scalar_lea.vmem [#allocation7], %s226
        %p228 = pneg %p89
        %p229 = pneg %p86
        %p230 = pneg %p115
        %p231 = pneg %p112
        %s232 = sand.u32 %s102, 1
        %s233 = scalar_lea.sflag [#allocation4], %s232
        %s234 = sand.u32 %s102, 1
        %s235 = smul.addr %s234, 128
        %s236 = scalar_lea.vmem [#allocation8], %s235
        %s237 = smul.u32 16, %s21
        %s238 = smul.u32 16, %s21
        %s239 = smul.u32 16, %s21
        %v241 = vld [vmem:[#allocation2] sm:$0xff]
        %v242 = vpack.c.bf16 %v241, %v241
        %v243 = vld [vmem:[%s200] sm:$0xff]
        %v244 = vld [vmem:[%s200 + $0x8] sm:$0xff]
        %v245 = vld [vmem:[%s200 + $0x10] sm:$0xff]
        %v246 = vld [vmem:[%s200 + $0x18] sm:$0xff]
        %v247 = vld [vmem:[%s200 + $0x20] sm:$0xff]
        %v248 = vld [vmem:[%s200 + $0x28] sm:$0xff]
        %v249 = vld [vmem:[%s200 + $0x30] sm:$0xff]
        %v250 = vld [vmem:[%s200 + $0x38] sm:$0xff]
        %v251 = vld [vmem:[%s200 + $0x40] sm:$0xff]
        %v252 = vld [vmem:[%s200 + $0x48] sm:$0xff]
        %v253 = vld [vmem:[%s200 + $0x50] sm:$0xff]
        %v254 = vld [vmem:[%s200 + $0x58] sm:$0xff]
        %v255 = vld [vmem:[%s200 + $0x60] sm:$0xff]
        %v256 = vld [vmem:[%s200 + $0x68] sm:$0xff]
        %v257 = vld [vmem:[%s200 + $0x70] sm:$0xff]
        %v258 = vld [vmem:[%s200 + $0x78] sm:$0xff]
        %v259 = vld [vmem:[%s209] sm:$0xff]
        %v260 = vld [vmem:[%s209 + $0x8] sm:$0xff]
        %v263 = vlaneseq
        %v264 = vshrl.u32 %v263, 7
        %v265 = vsub.s32 0, %v264
        %v266 = vrot.slane %v259, %v265
        %v267 = vlaneseq
        %v268 = vshrl.u32 %v267, 7
        %v269 = vsub.s32 1, %v268
        %v270 = vrot.slane %v259, %v269
        %v271 = vlaneseq
        %v272 = vshrl.u32 %v271, 7
        %v273 = vsub.s32 2, %v272
        %v274 = vrot.slane %v259, %v273
        %v275 = vlaneseq
        %v276 = vshrl.u32 %v275, 7
        %v277 = vsub.s32 3, %v276
        %v278 = vrot.slane %v259, %v277
        %v279 = vlaneseq
        %v280 = vshrl.u32 %v279, 7
        %v281 = vsub.s32 4, %v280
        %v282 = vrot.slane %v259, %v281
        %v283 = vlaneseq
        %v284 = vshrl.u32 %v283, 7
        %v285 = vsub.s32 5, %v284
        %v286 = vrot.slane %v259, %v285
        %v287 = vlaneseq
        %v288 = vshrl.u32 %v287, 7
        %v289 = vsub.s32 6, %v288
        %v290 = vrot.slane %v259, %v289
        %v291 = vlaneseq
        %v292 = vshrl.u32 %v291, 7
        %v293 = vsub.s32 7, %v292
        %v294 = vrot.slane %v259, %v293
        %v295 = vlaneseq
        %v296 = vshrl.u32 %v295, 7
        %v297 = vsub.s32 0, %v296
        %v298 = vrot.slane %v260, %v297
        %v299 = vlaneseq
        %v300 = vshrl.u32 %v299, 7
        %v301 = vsub.s32 1, %v300
        %v302 = vrot.slane %v260, %v301
        %v303 = vlaneseq
        %v304 = vshrl.u32 %v303, 7
        %v305 = vsub.s32 2, %v304
        %v306 = vrot.slane %v260, %v305
        %v307 = vlaneseq
        %v308 = vshrl.u32 %v307, 7
        %v309 = vsub.s32 3, %v308
        %v310 = vrot.slane %v260, %v309
        %v311 = vlaneseq
        %v312 = vshrl.u32 %v311, 7
        %v313 = vsub.s32 4, %v312
        %v314 = vrot.slane %v260, %v313
        %v315 = vlaneseq
        %v316 = vshrl.u32 %v315, 7
        %v317 = vsub.s32 5, %v316
        %v318 = vrot.slane %v260, %v317
        %v319 = vlaneseq
        %v320 = vshrl.u32 %v319, 7
        %v321 = vsub.s32 6, %v320
        %v322 = vrot.slane %v260, %v321
        %v323 = vlaneseq
        %v324 = vshrl.u32 %v323, 7
        %v325 = vsub.s32 7, %v324
        %v326 = vrot.slane %v260, %v325
        %v359 = vunpack.c.l.b16 %v243
        %v360 = vunpack.c.h.b16 %v243
        %v361 = vunpack.c.l.b16 %v244
        %v362 = vunpack.c.h.b16 %v244
        %v363 = vunpack.c.l.b16 %v245
        %v364 = vunpack.c.h.b16 %v245
        %v365 = vunpack.c.l.b16 %v246
        %v366 = vunpack.c.h.b16 %v246
        %v367 = vunpack.c.l.b16 %v247
        %v368 = vunpack.c.h.b16 %v247
        %v369 = vunpack.c.l.b16 %v248
        %v370 = vunpack.c.h.b16 %v248
        %v371 = vunpack.c.l.b16 %v249
        %v372 = vunpack.c.h.b16 %v249
        %v373 = vunpack.c.l.b16 %v250
        %v374 = vunpack.c.h.b16 %v250
        %v375 = vunpack.c.l.b16 %v251
        %v376 = vunpack.c.h.b16 %v251
        %v377 = vunpack.c.l.b16 %v252
        %v378 = vunpack.c.h.b16 %v252
        %v379 = vunpack.c.l.b16 %v253
        %v380 = vunpack.c.h.b16 %v253
        %v381 = vunpack.c.l.b16 %v254
        %v382 = vunpack.c.h.b16 %v254
        %v383 = vunpack.c.l.b16 %v255
        %v384 = vunpack.c.h.b16 %v255
        %v385 = vunpack.c.l.b16 %v256
        %v386 = vunpack.c.h.b16 %v256
        %v387 = vunpack.c.l.b16 %v257
        %v388 = vunpack.c.h.b16 %v257
        %v389 = vunpack.c.l.b16 %v258
        %v390 = vunpack.c.h.b16 %v258
        %v391 = vpack.c.b16 %v375, %v359
        %v392 = vpack.c.b16 %v376, %v360
        %v393 = vpack.c.b16 %v377, %v361
        %v394 = vpack.c.b16 %v378, %v362
        %v395 = vpack.c.b16 %v379, %v363
        %v396 = vpack.c.b16 %v380, %v364
        %v397 = vpack.c.b16 %v381, %v365
        %v398 = vpack.c.b16 %v382, %v366
        %v399 = vpack.c.b16 %v383, %v367
        %v400 = vpack.c.b16 %v384, %v368
        %v401 = vpack.c.b16 %v385, %v369
        %v402 = vpack.c.b16 %v386, %v370
        %v403 = vpack.c.b16 %v387, %v371
        %v404 = vpack.c.b16 %v388, %v372
        %v405 = vpack.c.b16 %v389, %v373
        %v406 = vpack.c.b16 %v390, %v374
        %vm423 = vcmask 130048
        %v425 = vsel %vm423, %v242, 0
        %427 = vmatprep.subr.bf16.mxu0 %v392
        %428 = vmatpush1.bf16.msra.mxu0 %v391
        %429 = vmatprep.subr.bf16.mxu0 0
        %430 = vmatpush1.bf16.msra.mxu0 0
        %431 = vmatprep.subr.bf16.mxu0 0
        %432 = vmatpush1.bf16.msra.mxu0 0
        %433 = vmatprep.subr.bf16.mxu0 0
        %434 = vmatpush1.bf16.msra.mxu0 0
        %435 = vmatprep.subr.bf16.mxu0 0
        %436 = vmatpush1.bf16.msra.mxu0 0
        %437 = vmatprep.subr.bf16.mxu0 0
        %438 = vmatpush1.bf16.msra.mxu0 0
        %439 = vmatprep.subr.bf16.mxu0 0
        %440 = vmatpush1.bf16.msra.mxu0 0
        %441 = vmatprep.subr.bf16.mxu0 0
        %442 = vmatpush1.bf16.msra.mxu0 0
        %443 = vmatprep.subr.bf16.mxu0 0
        %444 = vmatpush1.bf16.msra.mxu0 0
        %445 = vmatprep.subr.bf16.mxu0 0
        %446 = vmatpush1.bf16.msra.mxu0 0
        %447 = vmatprep.subr.bf16.mxu0 0
        %448 = vmatpush1.bf16.msra.mxu0 0
        %449 = vmatprep.subr.bf16.mxu0 0
        %450 = vmatpush1.bf16.msra.mxu0 0
        %451 = vmatprep.subr.bf16.mxu0 0
        %452 = vmatpush1.bf16.msra.mxu0 0
        %453 = vmatprep.subr.bf16.mxu0 0
        %454 = vmatpush1.bf16.msra.mxu0 0
        %455 = vmatprep.subr.bf16.mxu0 0
        %456 = vmatpush1.bf16.msra.mxu0 0
        %457 = vmatprep.subr.bf16.mxu0 0
        %458 = vmatpush1.bf16.msra.mxu0 0
        %459 = vmatprep.mubr.bf16.mxu0 0
        %460 = vmatmul.mubr.bf16.gmra.mrb[0].mxu0 %v425
        %v461 = vpop.f32.mrb[0].mxu0
        %v462 = vadd.f32 %v266, %v461
        %v463 = vpop.f32.mrb[0].mxu0
        %v464 = vadd.f32 %v270, %v463
        %v465 = vpop.f32.mrb[0].mxu0
        %v466 = vpop.f32.mrb[0].mxu0
        %467 = vdwg.mxu0
        %468 = vmatprep.subr.bf16.mxu0 %v394
        %469 = vmatpush1.bf16.msra.mxu0 %v393
        %470 = vmatprep.subr.bf16.mxu0 0
        %471 = vmatpush1.bf16.msra.mxu0 0
        %472 = vmatprep.subr.bf16.mxu0 0
        %473 = vmatpush1.bf16.msra.mxu0 0
        %474 = vmatprep.subr.bf16.mxu0 0
        %475 = vmatpush1.bf16.msra.mxu0 0
        %476 = vmatprep.subr.bf16.mxu0 0
        %477 = vmatpush1.bf16.msra.mxu0 0
        %478 = vmatprep.subr.bf16.mxu0 0
        %479 = vmatpush1.bf16.msra.mxu0 0
        %480 = vmatprep.subr.bf16.mxu0 0
        %481 = vmatpush1.bf16.msra.mxu0 0
        %482 = vmatprep.subr.bf16.mxu0 0
        %483 = vmatpush1.bf16.msra.mxu0 0
        %484 = vmatprep.subr.bf16.mxu0 0
        %485 = vmatpush1.bf16.msra.mxu0 0
        %486 = vmatprep.subr.bf16.mxu0 0
        %487 = vmatpush1.bf16.msra.mxu0 0
        %488 = vmatprep.subr.bf16.mxu0 0
        %489 = vmatpush1.bf16.msra.mxu0 0
        %490 = vmatprep.subr.bf16.mxu0 0
        %491 = vmatpush1.bf16.msra.mxu0 0
        %492 = vmatprep.subr.bf16.mxu0 0
        %493 = vmatpush1.bf16.msra.mxu0 0
        %494 = vmatprep.subr.bf16.mxu0 0
        %495 = vmatpush1.bf16.msra.mxu0 0
        %496 = vmatprep.subr.bf16.mxu0 0
        %497 = vmatpush1.bf16.msra.mxu0 0
        %498 = vmatprep.subr.bf16.mxu0 0
        %499 = vmatpush1.bf16.msra.mxu0 0
        %500 = vmatprep.mubr.bf16.mxu0 0
        %501 = vmatmul.mubr.bf16.gmra.mrb[0].mxu0 %v425
        %v502 = vpop.f32.mrb[0].mxu0
        %v503 = vadd.f32 %v274, %v502
        %v504 = vpop.f32.mrb[0].mxu0
        %v505 = vadd.f32 %v278, %v504
        %v506 = vpop.f32.mrb[0].mxu0
        %v507 = vpop.f32.mrb[0].mxu0
        %508 = vdwg.mxu0
        %509 = vmatprep.subr.bf16.mxu0 %v396
        %510 = vmatpush1.bf16.msra.mxu0 %v395
        %511 = vmatprep.subr.bf16.mxu0 0
        %512 = vmatpush1.bf16.msra.mxu0 0
        %513 = vmatprep.subr.bf16.mxu0 0
        %514 = vmatpush1.bf16.msra.mxu0 0
        %515 = vmatprep.subr.bf16.mxu0 0
        %516 = vmatpush1.bf16.msra.mxu0 0
        %517 = vmatprep.subr.bf16.mxu0 0
        %518 = vmatpush1.bf16.msra.mxu0 0
        %519 = vmatprep.subr.bf16.mxu0 0
        %520 = vmatpush1.bf16.msra.mxu0 0
        %521 = vmatprep.subr.bf16.mxu0 0
        %522 = vmatpush1.bf16.msra.mxu0 0
        %523 = vmatprep.subr.bf16.mxu0 0
        %524 = vmatpush1.bf16.msra.mxu0 0
        %525 = vmatprep.subr.bf16.mxu0 0
        %526 = vmatpush1.bf16.msra.mxu0 0
        %527 = vmatprep.subr.bf16.mxu0 0
        %528 = vmatpush1.bf16.msra.mxu0 0
        %529 = vmatprep.subr.bf16.mxu0 0
        %530 = vmatpush1.bf16.msra.mxu0 0
        %531 = vmatprep.subr.bf16.mxu0 0
        %532 = vmatpush1.bf16.msra.mxu0 0
        %533 = vmatprep.subr.bf16.mxu0 0
        %534 = vmatpush1.bf16.msra.mxu0 0
        %535 = vmatprep.subr.bf16.mxu0 0
        %536 = vmatpush1.bf16.msra.mxu0 0
        %537 = vmatprep.subr.bf16.mxu0 0
        %538 = vmatpush1.bf16.msra.mxu0 0
        %539 = vmatprep.subr.bf16.mxu0 0
        %540 = vmatpush1.bf16.msra.mxu0 0
        %541 = vmatprep.mubr.bf16.mxu0 0
        %542 = vmatmul.mubr.bf16.gmra.mrb[0].mxu0 %v425
        %v543 = vpop.f32.mrb[0].mxu0
        %v544 = vadd.f32 %v282, %v543
        %v545 = vpop.f32.mrb[0].mxu0
        %v546 = vadd.f32 %v286, %v545
        %v547 = vpop.f32.mrb[0].mxu0
        %v548 = vpop.f32.mrb[0].mxu0
        %549 = vdwg.mxu0
        %550 = vmatprep.subr.bf16.mxu0 %v398
        %551 = vmatpush1.bf16.msra.mxu0 %v397
        %552 = vmatprep.subr.bf16.mxu0 0
        %553 = vmatpush1.bf16.msra.mxu0 0
        %554 = vmatprep.subr.bf16.mxu0 0
        %555 = vmatpush1.bf16.msra.mxu0 0
        %556 = vmatprep.subr.bf16.mxu0 0
        %557 = vmatpush1.bf16.msra.mxu0 0
        %558 = vmatprep.subr.bf16.mxu0 0
        %559 = vmatpush1.bf16.msra.mxu0 0
        %560 = vmatprep.subr.bf16.mxu0 0
        %561 = vmatpush1.bf16.msra.mxu0 0
        %562 = vmatprep.subr.bf16.mxu0 0
        %563 = vmatpush1.bf16.msra.mxu0 0
        %564 = vmatprep.subr.bf16.mxu0 0
        %565 = vmatpush1.bf16.msra.mxu0 0
        %566 = vmatprep.subr.bf16.mxu0 0
        %567 = vmatpush1.bf16.msra.mxu0 0
        %568 = vmatprep.subr.bf16.mxu0 0
        %569 = vmatpush1.bf16.msra.mxu0 0
        %570 = vmatprep.subr.bf16.mxu0 0
        %571 = vmatpush1.bf16.msra.mxu0 0
        %572 = vmatprep.subr.bf16.mxu0 0
        %573 = vmatpush1.bf16.msra.mxu0 0
        %574 = vmatprep.subr.bf16.mxu0 0
        %575 = vmatpush1.bf16.msra.mxu0 0
        %576 = vmatprep.subr.bf16.mxu0 0
        %577 = vmatpush1.bf16.msra.mxu0 0
        %578 = vmatprep.subr.bf16.mxu0 0
        %579 = vmatpush1.bf16.msra.mxu0 0
        %580 = vmatprep.subr.bf16.mxu0 0
        %581 = vmatpush1.bf16.msra.mxu0 0
        %582 = vmatprep.mubr.bf16.mxu0 0
        %583 = vmatmul.mubr.bf16.gmra.mrb[0].mxu0 %v425
        %v584 = vpop.f32.mrb[0].mxu0
        %v585 = vadd.f32 %v290, %v584
        %v586 = vpop.f32.mrb[0].mxu0
        %v587 = vadd.f32 %v294, %v586
        %v588 = vpop.f32.mrb[0].mxu0
        %v589 = vpop.f32.mrb[0].mxu0
        %590 = vdwg.mxu0
        %591 = vmatprep.subr.bf16.mxu0 %v400
        %592 = vmatpush1.bf16.msra.mxu0 %v399
        %593 = vmatprep.subr.bf16.mxu0 0
        %594 = vmatpush1.bf16.msra.mxu0 0
        %595 = vmatprep.subr.bf16.mxu0 0
        %596 = vmatpush1.bf16.msra.mxu0 0
        %597 = vmatprep.subr.bf16.mxu0 0
        %598 = vmatpush1.bf16.msra.mxu0 0
        %599 = vmatprep.subr.bf16.mxu0 0
        %600 = vmatpush1.bf16.msra.mxu0 0
        %601 = vmatprep.subr.bf16.mxu0 0
        %602 = vmatpush1.bf16.msra.mxu0 0
        %603 = vmatprep.subr.bf16.mxu0 0
        %604 = vmatpush1.bf16.msra.mxu0 0
        %605 = vmatprep.subr.bf16.mxu0 0
        %606 = vmatpush1.bf16.msra.mxu0 0
        %607 = vmatprep.subr.bf16.mxu0 0
        %608 = vmatpush1.bf16.msra.mxu0 0
        %609 = vmatprep.subr.bf16.mxu0 0
        %610 = vmatpush1.bf16.msra.mxu0 0
        %611 = vmatprep.subr.bf16.mxu0 0
        %612 = vmatpush1.bf16.msra.mxu0 0
        %613 = vmatprep.subr.bf16.mxu0 0
        %614 = vmatpush1.bf16.msra.mxu0 0
        %615 = vmatprep.subr.bf16.mxu0 0
        %616 = vmatpush1.bf16.msra.mxu0 0
        %617 = vmatprep.subr.bf16.mxu0 0
        %618 = vmatpush1.bf16.msra.mxu0 0
        %619 = vmatprep.subr.bf16.mxu0 0
        %620 = vmatpush1.bf16.msra.mxu0 0
        %621 = vmatprep.subr.bf16.mxu0 0
        %622 = vmatpush1.bf16.msra.mxu0 0
        %623 = vmatprep.mubr.bf16.mxu0 0
        %624 = vmatmul.mubr.bf16.gmra.mrb[0].mxu0 %v425
        %v625 = vpop.f32.mrb[0].mxu0
        %v626 = vadd.f32 %v298, %v625
        %v627 = vpop.f32.mrb[0].mxu0
        %v628 = vadd.f32 %v302, %v627
        %v629 = vpop.f32.mrb[0].mxu0
        %v630 = vpop.f32.mrb[0].mxu0
        %631 = vdwg.mxu0
        %632 = vmatprep.subr.bf16.mxu0 %v402
        %633 = vmatpush1.bf16.msra.mxu0 %v401
        %634 = vmatprep.subr.bf16.mxu0 0
        %635 = vmatpush1.bf16.msra.mxu0 0
        %636 = vmatprep.subr.bf16.mxu0 0
        %637 = vmatpush1.bf16.msra.mxu0 0
        %638 = vmatprep.subr.bf16.mxu0 0
        %639 = vmatpush1.bf16.msra.mxu0 0
        %640 = vmatprep.subr.bf16.mxu0 0
        %641 = vmatpush1.bf16.msra.mxu0 0
        %642 = vmatprep.subr.bf16.mxu0 0
        %643 = vmatpush1.bf16.msra.mxu0 0
        %644 = vmatprep.subr.bf16.mxu0 0
        %645 = vmatpush1.bf16.msra.mxu0 0
        %646 = vmatprep.subr.bf16.mxu0 0
        %647 = vmatpush1.bf16.msra.mxu0 0
        %648 = vmatprep.subr.bf16.mxu0 0
        %649 = vmatpush1.bf16.msra.mxu0 0
        %650 = vmatprep.subr.bf16.mxu0 0
        %651 = vmatpush1.bf16.msra.mxu0 0
        %652 = vmatprep.subr.bf16.mxu0 0
        %653 = vmatpush1.bf16.msra.mxu0 0
        %654 = vmatprep.subr.bf16.mxu0 0
        %655 = vmatpush1.bf16.msra.mxu0 0
        %656 = vmatprep.subr.bf16.mxu0 0
        %657 = vmatpush1.bf16.msra.mxu0 0
        %658 = vmatprep.subr.bf16.mxu0 0
        %659 = vmatpush1.bf16.msra.mxu0 0
        %660 = vmatprep.subr.bf16.mxu0 0
        %661 = vmatpush1.bf16.msra.mxu0 0
        %662 = vmatprep.subr.bf16.mxu0 0
        %663 = vmatpush1.bf16.msra.mxu0 0
        %664 = vmatprep.mubr.bf16.mxu0 0
        %665 = vmatmul.mubr.bf16.gmra.mrb[0].mxu0 %v425
        %v666 = vpop.f32.mrb[0].mxu0
        %v667 = vadd.f32 %v306, %v666
        %v668 = vpop.f32.mrb[0].mxu0
        %v669 = vadd.f32 %v310, %v668
        %v670 = vpop.f32.mrb[0].mxu0
        %v671 = vpop.f32.mrb[0].mxu0
        %672 = vdwg.mxu0
        %673 = vmatprep.subr.bf16.mxu0 %v404
        %674 = vmatpush1.bf16.msra.mxu0 %v403
        %675 = vmatprep.subr.bf16.mxu0 0
        %676 = vmatpush1.bf16.msra.mxu0 0
        %677 = vmatprep.subr.bf16.mxu0 0
        %678 = vmatpush1.bf16.msra.mxu0 0
        %679 = vmatprep.subr.bf16.mxu0 0
        %680 = vmatpush1.bf16.msra.mxu0 0
        %681 = vmatprep.subr.bf16.mxu0 0
        %682 = vmatpush1.bf16.msra.mxu0 0
        %683 = vmatprep.subr.bf16.mxu0 0
        %684 = vmatpush1.bf16.msra.mxu0 0
        %685 = vmatprep.subr.bf16.mxu0 0
        %686 = vmatpush1.bf16.msra.mxu0 0
        %687 = vmatprep.subr.bf16.mxu0 0
        %688 = vmatpush1.bf16.msra.mxu0 0
        %689 = vmatprep.subr.bf16.mxu0 0
        %690 = vmatpush1.bf16.msra.mxu0 0
        %691 = vmatprep.subr.bf16.mxu0 0
        %692 = vmatpush1.bf16.msra.mxu0 0
        %693 = vmatprep.subr.bf16.mxu0 0
        %694 = vmatpush1.bf16.msra.mxu0 0
        %695 = vmatprep.subr.bf16.mxu0 0
        %696 = vmatpush1.bf16.msra.mxu0 0
        %697 = vmatprep.subr.bf16.mxu0 0
        %698 = vmatpush1.bf16.msra.mxu0 0
        %699 = vmatprep.subr.bf16.mxu0 0
        %700 = vmatpush1.bf16.msra.mxu0 0
        %701 = vmatprep.subr.bf16.mxu0 0
        %702 = vmatpush1.bf16.msra.mxu0 0
        %703 = vmatprep.subr.bf16.mxu0 0
        %704 = vmatpush1.bf16.msra.mxu0 0
        %705 = vmatprep.mubr.bf16.mxu0 0
        %706 = vmatmul.mubr.bf16.gmra.mrb[0].mxu0 %v425
        %v707 = vpop.f32.mrb[0].mxu0
        %v708 = vadd.f32 %v314, %v707
        %v709 = vpop.f32.mrb[0].mxu0
        %v710 = vadd.f32 %v318, %v709
        %v711 = vpop.f32.mrb[0].mxu0
        %v712 = vpop.f32.mrb[0].mxu0
        %713 = vdwg.mxu0
        %714 = vmatprep.subr.bf16.mxu0 %v406
        %715 = vmatpush1.bf16.msra.mxu0 %v405
        %716 = vmatprep.subr.bf16.mxu0 0
        %717 = vmatpush1.bf16.msra.mxu0 0
        %718 = vmatprep.subr.bf16.mxu0 0
        %719 = vmatpush1.bf16.msra.mxu0 0
        %720 = vmatprep.subr.bf16.mxu0 0
        %721 = vmatpush1.bf16.msra.mxu0 0
        %722 = vmatprep.subr.bf16.mxu0 0
        %723 = vmatpush1.bf16.msra.mxu0 0
        %724 = vmatprep.subr.bf16.mxu0 0
        %725 = vmatpush1.bf16.msra.mxu0 0
        %726 = vmatprep.subr.bf16.mxu0 0
        %727 = vmatpush1.bf16.msra.mxu0 0
        %728 = vmatprep.subr.bf16.mxu0 0
        %729 = vmatpush1.bf16.msra.mxu0 0
        %730 = vmatprep.subr.bf16.mxu0 0
        %731 = vmatpush1.bf16.msra.mxu0 0
        %732 = vmatprep.subr.bf16.mxu0 0
        %733 = vmatpush1.bf16.msra.mxu0 0
        %734 = vmatprep.subr.bf16.mxu0 0
        %735 = vmatpush1.bf16.msra.mxu0 0
        %736 = vmatprep.subr.bf16.mxu0 0
        %737 = vmatpush1.bf16.msra.mxu0 0
        %738 = vmatprep.subr.bf16.mxu0 0
        %739 = vmatpush1.bf16.msra.mxu0 0
        %740 = vmatprep.subr.bf16.mxu0 0
        %741 = vmatpush1.bf16.msra.mxu0 0
        %742 = vmatprep.subr.bf16.mxu0 0
        %743 = vmatpush1.bf16.msra.mxu0 0
        %744 = vmatprep.subr.bf16.mxu0 0
        %745 = vmatpush1.bf16.msra.mxu0 0
        %746 = vmatprep.mubr.bf16.mxu0 0
        %747 = vmatmul.mubr.bf16.gmra.mrb[0].mxu0 %v425
        %v748 = vpop.f32.mrb[0].mxu0
        %v749 = vadd.f32 %v322, %v748
        %v750 = vpop.f32.mrb[0].mxu0
        %v751 = vadd.f32 %v326, %v750
        %v752 = vpop.f32.mrb[0].mxu0
        %v753 = vpop.f32.mrb[0].mxu0
        %754 = vdwg.mxu0
        %vm755 = vcmp.gt.f32.partialorder %v462, 0.0
        %vm756 = vcmp.gt.f32.partialorder %v464, 0.0
        %vm757 = vcmp.gt.f32.partialorder %v503, 0.0
        %vm758 = vcmp.gt.f32.partialorder %v505, 0.0
        %vm759 = vcmp.gt.f32.partialorder %v544, 0.0
        %vm760 = vcmp.gt.f32.partialorder %v546, 0.0
        %vm761 = vcmp.gt.f32.partialorder %v585, 0.0
        %vm762 = vcmp.gt.f32.partialorder %v587, 0.0
        %vm763 = vcmp.gt.f32.partialorder %v626, 0.0
        %vm764 = vcmp.gt.f32.partialorder %v628, 0.0
        %vm765 = vcmp.gt.f32.partialorder %v667, 0.0
        %vm766 = vcmp.gt.f32.partialorder %v669, 0.0
        %vm767 = vcmp.gt.f32.partialorder %v708, 0.0
        %vm768 = vcmp.gt.f32.partialorder %v710, 0.0
        %vm769 = vcmp.gt.f32.partialorder %v749, 0.0
        %vm770 = vcmp.gt.f32.partialorder %v751, 0.0
        %v771 = vmul.f32 %v462, 0.01
        %v772 = vmul.f32 %v464, 0.01
        %v773 = vmul.f32 %v503, 0.01
        %v774 = vmul.f32 %v505, 0.01
        %v775 = vmul.f32 %v544, 0.01
        %v776 = vmul.f32 %v546, 0.01
        %v777 = vmul.f32 %v585, 0.01
        %v778 = vmul.f32 %v587, 0.01
        %v779 = vmul.f32 %v626, 0.01
        %v780 = vmul.f32 %v628, 0.01
        %v781 = vmul.f32 %v667, 0.01
        %v782 = vmul.f32 %v669, 0.01
        %v783 = vmul.f32 %v708, 0.01
        %v784 = vmul.f32 %v710, 0.01
        %v785 = vmul.f32 %v749, 0.01
        %v786 = vmul.f32 %v751, 0.01
        %v787 = vsel %vm755, %v462, %v771
        %v788 = vsel %vm756, %v464, %v772
        %v789 = vsel %vm757, %v503, %v773
        %v790 = vsel %vm758, %v505, %v774
        %v791 = vsel %vm759, %v544, %v775
        %v792 = vsel %vm760, %v546, %v776
        %v793 = vsel %vm761, %v585, %v777
        %v794 = vsel %vm762, %v587, %v778
        %v795 = vsel %vm763, %v626, %v779
        %v796 = vsel %vm764, %v628, %v780
        %v797 = vsel %vm765, %v667, %v781
        %v798 = vsel %vm766, %v669, %v782
        %v799 = vsel %vm767, %v708, %v783
        %v800 = vsel %vm768, %v710, %v784
        %v801 = vsel %vm769, %v749, %v785
        %v802 = vsel %vm770, %v751, %v786
        %803 = vst [vmem:[%s236] sm:$0xff] %v787
        %804 = vst [vmem:[%s236 + $0x8] sm:$0xff] %v788
        %805 = vst [vmem:[%s236 + $0x10] sm:$0xff] %v789
        %806 = vst [vmem:[%s236 + $0x18] sm:$0xff] %v790
        %807 = vst [vmem:[%s236 + $0x20] sm:$0xff] %v791
        %808 = vst [vmem:[%s236 + $0x28] sm:$0xff] %v792
        %809 = vst [vmem:[%s236 + $0x30] sm:$0xff] %v793
        %810 = vst [vmem:[%s236 + $0x38] sm:$0xff] %v794
        %811 = vst [vmem:[%s236 + $0x40] sm:$0xff] %v795
        %812 = vst [vmem:[%s236 + $0x48] sm:$0xff] %v796
        %813 = vst [vmem:[%s236 + $0x50] sm:$0xff] %v797
        %814 = vst [vmem:[%s236 + $0x58] sm:$0xff] %v798
        %815 = vst [vmem:[%s236 + $0x60] sm:$0xff] %v799
        %816 = vst [vmem:[%s236 + $0x68] sm:$0xff] %v800
        %817 = vst [vmem:[%s236 + $0x70] sm:$0xff] %v801
        %818 = vst [vmem:[%s236 + $0x78] sm:$0xff] %v802
        %s819 = sand.u32 %s102, 1
        %s820 = scalar_lea.sflag [#allocation4], %s819
        %s821 = sand.u32 %s102, 1
        %s822 = smul.addr %s821, 128
        %s823 = scalar_lea.vmem [#allocation8], %s822
        // Predicated region
        $region45: #{tpu_custom_call.1} parent=31 // pred_check
          %p824 = pneg %p112
        $region46: #{tpu_custom_call.1} parent=31 // pred_check_branch
          %826 = sbr.rel (%p824) target = $region48
        $region47: #{tpu_custom_call.1} parent=31 // pred_region
          %s827 = smul.u32 16, %s21
          %s829 = ssub.s32 2048, 2048
          %830 = vsyncadd %s820, %s829
          %s831 = smul.addr %s827, 128
          %s832 = scalar_lea.hbm %s3, %s831
          %s834 = sshll.u32 %s823, 4
          %s835 = int_to_ptr.vmem [resolvable:$true] %s834
          %837 = dma.vmem_to_hbm [thread:$0]  %s835, 2048, %s832, %s820
        $region48: #{tpu_custom_call.1} parent=31 // pred_fallthru
          _
      $region32: #{tpu_custom_call.1} parent=5 // pred_fallthru
        _
      %p838 = scmp.le.s32.totalorder 2, %s16
      // Predicated region
      $region49: #{tpu_custom_call.1} parent=5 // pred_check
        %p839 = pneg %p838
      $region50: #{tpu_custom_call.1} parent=5 // pred_check_branch
        %841 = sbr.rel (%p839) target = $region52
      $region51: #{tpu_custom_call.1} parent=5 // pred_region
        %s842 = ssub.s32 %s16, 2
        // Predicated region
        $region53: #{tpu_custom_call.1} parent=51 // pred_check
          %p843 = pneg %p118
        $region54: #{tpu_custom_call.1} parent=51 // pred_check_branch
          %845 = sbr.rel (%p843) target = $region56
        $region55: #{tpu_custom_call.1} parent=51 // pred_region
          %s846 = sand.u32 %s103, 1
          %s847 = scalar_lea.sflag [#allocation4], %s846
          %s848 = sand.u32 %s103, 1
          %s849 = smul.addr %s848, 128
          %s850 = scalar_lea.vmem [#allocation8], %s849
          %851 = dma.done %s847, 2048
        $region56: #{tpu_custom_call.1} parent=51 // pred_fallthru
          _
      $region52: #{tpu_custom_call.1} parent=5 // pred_fallthru
        _
    $region6: #{tpu_custom_call.1} parent=1 // loop_footer
      %s20 = sadd.s32 1, %s16
    $region7: #{tpu_custom_call.1} parent=1 // loop_footer_branch
      %15 = sbr.rel target = $region3
    $region8: #{tpu_custom_call.1} parent=1 // loop_exit
      _
    %852 = vsyncpa [#allocation3], 1
    %s853 = scalar_lea.sflag [#allocation3], 1
    %854 = vsyncpa %s853, 1
    %855 = vsyncpa [#allocation6], 1
    %s856 = scalar_lea.sflag [#allocation6], 1
    %857 = vsyncpa %s856, 1
    %858 = vsyncpa [#allocation4], 1
    %s859 = scalar_lea.sflag [#allocation4], 1
    %860 = vsyncpa %s859, 1

</llo_original>
